<compile_context>
chip_gen: v6e
topology: v6e:2x2x1
jax: 0.10.0
libtpu: 0.0.40
codegen_flags: <defaults>
</compile_context>

<pallas_src>
import jax
import jax.numpy as jnp
from jax.experimental import pallas as pl
from jax.experimental.pallas import tpu as pltpu

EPS = 1e-5


# ---------------------------------------------------------------------------
# Pallas kernel factory: fused KxK conv (stride, dilation) + folded-BN bias
# + optional fused temporal shift on the input + optional residual + ReLU.
# One grid step processes `b_tile` images (a whole clip when TSM is fused).
# ---------------------------------------------------------------------------
def _make_conv_kernel(*, ksize, stride, dilation, pad, n_shift,
                      add_residual, apply_relu, use_scratch):
    def kernel(*refs):
        refs = list(refs)
        x_ref = refs.pop(0)                       # (b_tile, H, W, Cin)   io dtype
        w_ref = refs.pop(0)                       # (k, k, Cin, Cout)     io dtype (BN-scaled)
        b_ref = refs.pop(0)                       # (1, Cout)             f32 folded bias
        res_ref = refs.pop(0) if add_residual else None   # (M, Cout) f32
        o_ref = refs.pop(0)                       # (M, Cout) f32, M = b_tile*Ho*Wo
        xpad_ref = refs.pop(0) if use_scratch else None    # f32 padded scratch

        bt, h, w, cin = x_ref.shape
        ho = (h + 2 * pad - dilation * (ksize - 1) - 1) // stride + 1
        wo = (w + 2 * pad - dilation * (ksize - 1) - 1) // stride + 1
        m = bt * ho * wo
        cout = o_ref.shape[-1]
        assert m == o_ref.shape[0]

        if use_scratch:
            # Zero every invocation (safe under megacore "parallel" partitioning).
            if pad > 0 or n_shift > 0:
                xpad_ref[...] = jnp.zeros(xpad_ref.shape, xpad_ref.dtype)
            if n_shift == 0:
                xpad_ref[:, pad:pad + h, pad:pad + w, :] = (
                    x_ref[...].astype(jnp.float32))
            else:
                ns = n_shift
                # Temporal shift fused into the input copy (block == one clip):
                # first ns channels come from the previous frame, last ns from
                # the next frame, temporal borders stay zero.
                xpad_ref[1:bt, pad:pad + h, pad:pad + w, 0:ns] = (
                    x_ref[0:bt - 1, :, :, 0:ns].astype(jnp.float32))
                if cin > 2 * ns:
                    xpad_ref[:, pad:pad + h, pad:pad + w, ns:cin - ns] = (
                        x_ref[:, :, :, ns:cin - ns].astype(jnp.float32))
                xpad_ref[0:bt - 1, pad:pad + h, pad:pad + w, cin - ns:cin] = (
                    x_ref[1:bt, :, :, cin - ns:cin].astype(jnp.float32))
            src = xpad_ref
        else:
            src = x_ref

        acc = jnp.zeros((m, cout), jnp.float32)
        for dy in range(ksize):
            for dx in range(ksize):
                oy, ox = dy * dilation, dx * dilation
                if stride == 1:
                    patch = src[:, oy:oy + ho, ox:ox + wo, :]
                else:
                    patch = src[:, pl.ds(oy, ho, stride=stride),
                                pl.ds(ox, wo, stride=stride), :]
                acc = acc + jnp.dot(
                    patch.astype(w_ref.dtype).reshape(m, cin),
                    w_ref[dy, dx],
                    preferred_element_type=jnp.float32)

        out = acc + b_ref[0]
        if add_residual:
            out = out + res_ref[...]
        if apply_relu:
            out = jnp.maximum(out, 0.0)
        o_ref[...] = out

    return kernel


def conv_bn(x, w, gamma, beta, mean, var, *, stride=1, dilation=1, relu=False,
            residual=None, n_shift=0, b_tile=1, io_dtype=jnp.bfloat16):
    """Conv(kxk, pad=dil*(k//2), bias=False) + folded BN (+res)(+relu). x: NHWC f32.

    If n_shift > 0 the temporal shift is fused into the conv input; in that case
    b_tile must equal num_frames and frames of a clip must be contiguous.
    """
    n, h, wd, cin = x.shape
    k = w.shape[0]
    cout = w.shape[-1]
    pad = dilation * (k // 2)
    ho = (h + 2 * pad - dilation * (k - 1) - 1) // stride + 1
    wo = (wd + 2 * pad - dilation * (k - 1) - 1) // stride + 1
    assert n % b_tile == 0, (n, b_tile)
    if n_shift > 0:
        assert b_tile >= 2

    # Fold the BN scale into the conv weights; bias stays f32.
    scale = gamma / jnp.sqrt(var + EPS)
    bias = (beta - mean * scale).astype(jnp.float32).reshape(1, cout)
    wk = (w * scale.reshape(1, 1, 1, cout)).astype(io_dtype)
    xk = x.astype(io_dtype)

    use_scratch = (pad > 0) or (n_shift > 0) or (stride > 1)
    add_res = residual is not None
    m_tile = b_tile * ho * wo

    in_specs = [
        pl.BlockSpec((b_tile, h, wd, cin), lambda i: (i, 0, 0, 0)),
        pl.BlockSpec((k, k, cin, cout), lambda i: (0, 0, 0, 0)),
        pl.BlockSpec((1, cout), lambda i: (0, 0)),
    ]
    inputs = [xk, wk, bias]
    if add_res:
        in_specs.append(pl.BlockSpec((m_tile, cout), lambda i: (i, 0)))
        inputs.append(residual.reshape(n * ho * wo, cout).astype(jnp.float32))

    scratch_shapes = []
    if use_scratch:
        # f32 scratch: avoids packed-dtype alignment issues for the padded /
        # shifted / strided accesses; taps are cast to io_dtype before the MXU.
        scratch_shapes.append(
            pltpu.VMEM((b_tile, h + 2 * pad, wd + 2 * pad, cin), jnp.float32))

    kernel = _make_conv_kernel(ksize=k, stride=stride, dilation=dilation,
                               pad=pad, n_shift=n_shift, add_residual=add_res,
                               apply_relu=relu, use_scratch=use_scratch)

    itemsize = jnp.dtype(io_dtype).itemsize
    bytes_accessed = (n * h * wd * cin + k * k * cin * cout) * itemsize
    bytes_accessed += n * ho * wo * cout * 4
    if add_res:
        bytes_accessed += n * ho * wo * cout * 4
    cost = pl.CostEstimate(flops=2 * n * ho * wo * k * k * cin * cout,
                           transcendentals=0, bytes_accessed=bytes_accessed)

    out = pl.pallas_call(
        kernel,
        out_shape=jax.ShapeDtypeStruct((n * ho * wo, cout), jnp.float32),
        grid=(n // b_tile,),
        in_specs=in_specs,
        out_specs=pl.BlockSpec((m_tile, cout), lambda i: (i, 0)),
        scratch_shapes=scratch_shapes,
        compiler_params=pltpu.CompilerParams(
            dimension_semantics=("parallel",),
            vmem_limit_bytes=32 * 1024 * 1024),
        cost_estimate=cost,
    )(*inputs)
    return out.reshape(n, ho, wo, cout)


# ---------------------------------------------------------------------------
# TSMResNetBlockV1 forward (NCHW in / NCHW out, like the PyTorch module).
# ---------------------------------------------------------------------------
def tsm_resnet_block_v1(x_nchw, params, *, stride, use_projection,
                        channel_shift_fraction, num_frames, dilation=1,
                        use_bottleneck=False, io_dtype=jnp.bfloat16):
    x = jnp.transpose(x_nchw, (0, 2, 3, 1)).astype(jnp.float32)      # -> NHWC
    n, h, w, cin = x.shape
    assert n % num_frames == 0
    b_tile = num_frames                      # one clip per grid step (TSM-local)
    n_shift = int(cin * channel_shift_fraction)

    if use_projection:
        shortcut = conv_bn(x, params["proj_w"], *params["proj_bn"],
                           stride=stride, relu=False, b_tile=b_tile,
                           io_dtype=io_dtype)
    else:
        co = params["w3"].shape[-1]
        assert stride == 1 and cin == co, \
            "identity shortcut requires stride=1 and in_channels == out_channels"
        shortcut = x

    if use_bottleneck:
        # pytorch style: conv1_stride=1, conv2_stride=stride
        r = conv_bn(x, params["w1"], *params["bn1"], stride=1, relu=True,
                    n_shift=n_shift, b_tile=b_tile, io_dtype=io_dtype)
        r = conv_bn(r, params["w2"], *params["bn2"], stride=stride,
                    dilation=dilation, relu=True, b_tile=b_tile,
                    io_dtype=io_dtype)
        out = conv_bn(r, params["w3"], *params["bn3"], stride=1, relu=True,
                      residual=shortcut, b_tile=b_tile, io_dtype=io_dtype)
    else:
        r = conv_bn(x, params["w1"], *params["bn1"], stride=stride, relu=True,
                    n_shift=n_shift, b_tile=b_tile, io_dtype=io_dtype)
        out = conv_bn(r, params["w3"], *params["bn3"], stride=1, relu=True,
                      residual=shortcut, b_tile=b_tile, io_dtype=io_dtype)

    return jnp.transpose(out, (0, 3, 1, 2))                          # -> NCHW


# ---------------------------------------------------------------------------
# Pure-JAX references (for correctness check of the Pallas path).
# ---------------------------------------------------------------------------
def apply_temporal_shift(x, num_frames, channel_shift_fraction):
    nt, h, w, c = x.shape
    n_shift = int(c * channel_shift_fraction)
    if n_shift == 0:
        return x
    x5 = x.reshape(nt // num_frames, num_frames, h, w, c)
    fwd = jnp.pad(x5[:, :-1, :, :, :n_shift],
                  ((0, 0), (1, 0), (0, 0), (0, 0), (0, 0)))
    bwd = jnp.pad(x5[:, 1:, :, :, c - n_shift:],
                  ((0, 0), (0, 1), (0, 0), (0, 0), (0, 0)))
    mid = x5[:, :, :, :, n_shift:c - n_shift]
    return jnp.concatenate([fwd, mid, bwd], axis=-1).reshape(nt, h, w, c)


def _ref_conv_bn(x, w, bn, *, stride, dilation, relu, residual=None,
                 io_dtype=None):
    gamma, beta, mean, var = bn
    p = dilation * (w.shape[0] // 2)
    if io_dtype is None:
        y = jax.lax.conv_general_dilated(
            x, w, (stride, stride), [(p, p), (p, p)],
            rhs_dilation=(dilation, dilation),
            dimension_numbers=("NHWC", "HWIO", "NHWC"))
        y = (y - mean) / jnp.sqrt(var + EPS) * gamma + beta
    else:
        scale = gamma / jnp.sqrt(var + EPS)
        wf = (w * scale.reshape(1, 1, 1, -1)).astype(io_dtype)
        y = jax.lax.conv_general_dilated(
            x.astype(io_dtype), wf, (stride, stride), [(p, p), (p, p)],
            rhs_dilation=(dilation, dilation),
            dimension_numbers=("NHWC", "HWIO", "NHWC"),
            preferred_element_type=jnp.float32)
        y = y + (beta - mean * scale)
    if residual is not None:
        y = y + residual
    if relu:
        y = jax.nn.relu(y)
    return y


def reference_block(x_nchw, params, *, stride, use_projection,
                    channel_shift_fraction, num_frames, dilation=1,
                    use_bottleneck=False, match_io_dtype=None):
    x = jnp.transpose(x_nchw, (0, 2, 3, 1)).astype(jnp.float32)
    if use_projection:
        shortcut = _ref_conv_bn(x, params["proj_w"], params["proj_bn"],
                                stride=stride, dilation=1, relu=False,
                                io_dtype=match_io_dtype)
    else:
        shortcut = x
    preact = x
    if channel_shift_fraction != 0:
        preact = apply_temporal_shift(x, num_frames, channel_shift_fraction)
    if use_bottleneck:
        r = _ref_conv_bn(preact, params["w1"], params["bn1"], stride=1,
                         dilation=1, relu=True, io_dtype=match_io_dtype)
        r = _ref_conv_bn(r, params["w2"], params["bn2"], stride=stride,
                         dilation=dilation, relu=True, io_dtype=match_io_dtype)
        out = _ref_conv_bn(r, params["w3"], params["bn3"], stride=1, dilation=1,
                           relu=True, residual=shortcut,
                           io_dtype=match_io_dtype)
    else:
        r = _ref_conv_bn(preact, params["w1"], params["bn1"], stride=stride,
                         dilation=1, relu=True, io_dtype=match_io_dtype)
        out = _ref_conv_bn(r, params["w3"], params["bn3"], stride=1, dilation=1,
                           relu=True, residual=shortcut,
                           io_dtype=match_io_dtype)
    return jnp.transpose(out, (0, 3, 1, 2))


# ---------------------------------------------------------------------------
def init_params(key, in_channels, out_channels):
    cb = out_channels // 4          # bottleneck channels
    co = out_channels // 4          # non-bottleneck _out_channels
    ks = jax.random.split(key, 8)

    def bn(k, c):
        k1, k2, k3, k4 = jax.random.split(k, 4)
        gamma = 0.5 + jax.random.uniform(k1, (c,), jnp.float32)
        beta = 0.1 * jax.random.normal(k2, (c,), jnp.float32)
        mean = 0.1 * jax.random.normal(k3, (c,), jnp.float32)
        var = 0.5 + jax.random.uniform(k4, (c,), jnp.float32)
        return (gamma, beta, mean, var)

    return {
        "w1": 0.1 * jax.random.normal(ks[0], (3, 3, in_channels, cb), jnp.float32),
        "bn1": bn(ks[1], cb),
        "w2": 0.1 * jax.random.normal(ks[2], (3, 3, cb, cb), jnp.float32),
        "bn2": bn(ks[3], cb),
        "w3": 0.1 * jax.random.normal(ks[4], (3, 3, cb, co), jnp.float32),
        "bn3": bn(ks[5], co),
        "proj_w": 0.1 * jax.random.normal(ks[6], (1, 1, in_channels, co), jnp.float32),
        "proj_bn": bn(ks[7], co),
    }


if __name__ == "__main__":
    B, T, H, W = 2, 8, 8, 8
    out_channels = 64                       # non-bottleneck block width = 16
    key = jax.random.PRNGKey(0)
    k1, k2, k3 = jax.random.split(key, 3)

    # (name, in_channels, stride, use_projection, io_dtype, rng)
    cases = [
        ("s1_proj_f32",   8, 1, True,  jnp.float32,  k1),
        ("s1_proj_bf16",  8, 1, True,  jnp.bfloat16, k1),
        ("s2_proj_bf16",  8, 2, True,  jnp.bfloat16, k2),
        ("s1_ident_f32", 16, 1, False, jnp.float32,  k3),
    ]

    for name, cin, stride, use_proj, io_dtype, kk in cases:
        kx, kp = jax.random.split(kk)
        x = jax.random.normal(kx, (B * T, cin, H, W), jnp.float32)   # NCHW
        params = init_params(kp, cin, out_channels)
        cfg = dict(stride=stride, use_projection=use_proj,
                   channel_shift_fraction=0.125, num_frames=T)

        out = tsm_resnet_block_v1(x, params, use_bottleneck=False,
                                  io_dtype=io_dtype, **cfg)
        out = jax.block_until_ready(out)

        if io_dtype is jnp.bfloat16:
            ref = reference_block(x, params, match_io_dtype=jnp.bfloat16, **cfg)
            atol = rtol = 1e-2
        else:
            ref = reference_block(x, params, match_io_dtype=None, **cfg)
            atol = rtol = 1e-3
        ref = jax.block_until_ready(ref)

        ho = (H + 2 - 2 - 1) // stride + 1
        assert out.shape == ref.shape == (B * T, out_channels // 4, ho, ho), \
            (name, out.shape)
        max_err = float(jnp.max(jnp.abs(out - ref)))
        assert jnp.allclose(out, ref, atol=atol, rtol=rtol), (name, max_err)

    print("KERNEL_OK")
</pallas_src>

<mosaic_0001>
module attributes {stable_mosaic.version = 11 : i64} {
  func.func @kernel(%arg0: i32, %arg1: memref<8x8x8x8xf32, #tpu.memory_space<vmem>>, %arg2: memref<1x1x8x16xf32, #tpu.memory_space<vmem>>, %arg3: memref<1x16xf32, #tpu.memory_space<vmem>>, %arg4: memref<512x16xf32, #tpu.memory_space<vmem>>) attributes {dimension_semantics = [#tpu.dimension_semantics<parallel>], iteration_bounds = array<i64: 2>, scalar_prefetch = 0 : i64, scratch_operands = 0 : i64, tpu.core_type = #tpu.core_type<tc>, window_params = [{transform_indices = @transform_0, window_bounds = array<i64: 8, 8, 8, 8>}, {pipeline_mode = #tpu.pipeline_mode<synchronous>, transform_indices = @transform_1, window_bounds = array<i64: 1, 1, 8, 16>}, {pipeline_mode = #tpu.pipeline_mode<synchronous>, transform_indices = @transform_2, window_bounds = array<i64: 1, 16>}, {transform_indices = @transform_3, window_bounds = array<i64: 512, 16>}]} {
    %cst = arith.constant 0.000000e+00 : f32
    %0 = vector.broadcast %cst : f32 to vector<512x16xf32>
    %c0 = arith.constant 0 : index
    %c0_0 = arith.constant 0 : index
    %c0_1 = arith.constant 0 : index
    %c0_2 = arith.constant 0 : index
    %1 = vector.load %arg1[%c0, %c0_0, %c0_1, %c0_2] : memref<8x8x8x8xf32, #tpu.memory_space<vmem>>, vector<8x8x8x8xf32>
    %2 = vector.shape_cast %1 : vector<8x8x8x8xf32> to vector<512x8xf32>
    %c0_3 = arith.constant 0 : index
    %c0_4 = arith.constant 0 : index
    %c0_5 = arith.constant 0 : index
    %c0_6 = arith.constant 0 : index
    %3 = vector.load %arg2[%c0_3, %c0_4, %c0_5, %c0_6] : memref<1x1x8x16xf32, #tpu.memory_space<vmem>>, vector<1x1x8x16xf32>
    %4 = vector.shape_cast %3 : vector<1x1x8x16xf32> to vector<8x16xf32>
    %cst_7 = arith.constant dense<0.000000e+00> : vector<512x16xf32>
    %5 = tpu.matmul %2, %4, %cst_7 {dimension_numbers = #tpu.dot_dimension_numbers<[1], [0], [0], [1], [0, 0, 1, 1], [], []>} : vector<512x8xf32>, vector<8x16xf32>, vector<512x16xf32> -> vector<512x16xf32>
    %6 = arith.addf %0, %5 : vector<512x16xf32>
    %c0_8 = arith.constant 0 : index
    %c0_9 = arith.constant 0 : index
    %7 = vector.load %arg3[%c0_8, %c0_9] : memref<1x16xf32, #tpu.memory_space<vmem>>, vector<1x16xf32>
    %8 = vector.shape_cast %7 : vector<1x16xf32> to vector<16xf32>
    %9 = vector.shape_cast %8 : vector<16xf32> to vector<1x16xf32>
    %10 = vector.broadcast %9 : vector<1x16xf32> to vector<512x16xf32>
    %11 = arith.addf %6, %10 : vector<512x16xf32>
    %c0_10 = arith.constant 0 : index
    %c0_11 = arith.constant 0 : index
    %12 = vector.load %arg4[%c0_10, %c0_11] : memref<512x16xf32, #tpu.memory_space<vmem>>, vector<512x16xf32>
    tpu.vector_store %arg4[%c0_10, %c0_11], %11 {strides = array<i32>} : memref<512x16xf32, #tpu.memory_space<vmem>>, vector<512x16xf32>,
    return
  }
  func.func @transform_0(%arg0: i32) -> (i32, i32, i32, i32) {
    %c0_i32 = arith.constant 0 : i32
    %c0_i32_0 = arith.constant 0 : i32
    %c0_i32_1 = arith.constant 0 : i32
    %c0_i32_2 = arith.constant 0 : i32
    return %arg0, %c0_i32, %c0_i32_0, %c0_i32_1 : i32, i32, i32, i32
  }
  func.func @transform_1(%arg0: i32) -> (i32, i32, i32, i32) {
    %c0_i32 = arith.constant 0 : i32
    %c0_i32_0 = arith.constant 0 : i32
    %c0_i32_1 = arith.constant 0 : i32
    %c0_i32_2 = arith.constant 0 : i32
    %c0_i32_3 = arith.constant 0 : i32
    return %c0_i32, %c0_i32_0, %c0_i32_1, %c0_i32_2 : i32, i32, i32, i32
  }
  func.func @transform_2(%arg0: i32) -> (i32, i32) {
    %c0_i32 = arith.constant 0 : i32
    %c0_i32_0 = arith.constant 0 : i32
    %c0_i32_1 = arith.constant 0 : i32
    return %c0_i32, %c0_i32_0 : i32, i32
  }
  func.func @transform_3(%arg0: i32) -> (i32, i32) {
    %c0_i32 = arith.constant 0 : i32
    %c0_i32_0 = arith.constant 0 : i32
    return %arg0, %c0_i32 : i32, i32
  }
}

</mosaic_0001>

<llo_original>
// kernel: tpu_custom_call.1
$region0: #{tpu_custom_call.1}
  #allocation0 [shape = 'u32[]', space=smem, size = 0x4, offset = 0x4, fixed_abs, tag = 'smem constant byte address 0x4 - core index']
  #allocation1 [shape = 'u32[144,128]{1,0:T(1,128)}', space=vmem, size = 0x12000, scoped, tag = 'internal scratch']
  %s0 = inlined_call_operand.vmem [shape: f32[16,8,8,8], index: 0, kind: input, shape index: {}]
  %s1 = inlined_call_operand.vmem [shape: f32[1,1,8,16], index: 1, kind: input, shape index: {}]
  %s2 = inlined_call_operand.vmem [shape: f32[1,16], index: 2, kind: input, shape index: {}]
  %s3 = inlined_call_operand.vmem [shape: f32[1024,16], index: 3, kind: output, shape index: {}]
  %s4 = sld [smem:[#allocation0]]
  $region45: #{tpu_custom_call.1} parent=0
    _
  %s6 = ssub.s32 1, %s4
  %s7 = scalar_select 0, %s6, %s4
  loop: start=0, step=1, limit=4
  $region2: #{tpu_custom_call.1} parent=0 // loop_pre_header
    _
  $region3: #{tpu_custom_call.1} parent=0 // loop_header
    %s9 = sphi 0, %s13
    %p10 = scmp.ge.s32.totalorder %s9, 4
    %s19 = sphi 0, %s21
    %s22 = sphi 0, %s19
    %s23 = sphi 0, %s22
    %s39 = sphi 0, %s23
    %s43 = sphi 0, %s43
    %s45 = sphi 0, %s43
    %s46 = sphi 0, %s45
    %s60 = sphi 0, %s46
    %s64 = sphi 0, %s64
    %s66 = sphi 0, %s64
    %s67 = sphi 0, %s66
    %s81 = sphi 0, %s67
    %s87 = sphi 0, %s89
    %s90 = sphi 0, %s87
    %s91 = sphi 0, %s90
    %s107 = sphi 0, %s91
  $region4: #{tpu_custom_call.1} parent=0 // loop_header_branch
    %12 = sbr.rel (%p10) target = $region8
  $region5: #{tpu_custom_call.1} parent=0 // loop_body
    %s14 = ssub.s32 %s9, 1
    %s15 = ssub.s32 %s9, 2
    %s16 = sadd.s32 %s9, 1
    %s17 = ssub.s32 %s9, %s16
    %p18 = scmp.eq.s32.totalorder %s17, 0
    %s20 = sadd.s32 %s19, 1
    %s21 = scalar_select %p18, %s19, %s20
    %p24 = pneg %p18
    %p25 = scmp.eq.s32.totalorder %s9, 1
    %p26 = por %p24, %p25
    %p27 = scmp.ne.s32.totalorder %s19, %s22
    %p28 = scmp.eq.s32.totalorder %s9, 0
    %p29 = por %p27, %p28
    %p30 = scmp.ne.s32.totalorder %s19, %s22
    %p31 = scmp.eq.s32.totalorder %s14, 1
    %p32 = por %p30, %p31
    %p33 = scmp.ne.s32.totalorder %s22, %s23
    %p34 = scmp.eq.s32.totalorder %s14, 0
    %p35 = por %p33, %p34
    %p36 = scmp.ne.s32.totalorder %s22, %s23
    %p37 = scmp.eq.s32.totalorder %s15, 1
    %p38 = por %p36, %p37
    %p40 = scmp.ne.s32.totalorder %s23, %s39
    %p41 = scmp.eq.s32.totalorder %s15, 0
    %p42 = por %p40, %p41
    %s44 = sadd.s32 %s43, 1
    %p47 = scmp.eq.s32.totalorder %s9, 1
    %p48 = scmp.ne.s32.totalorder %s43, %s45
    %p49 = scmp.eq.s32.totalorder %s9, 0
    %p50 = por %p48, %p49
    %p51 = scmp.ne.s32.totalorder %s43, %s45
    %p52 = scmp.eq.s32.totalorder %s14, 1
    %p53 = por %p51, %p52
    %p54 = scmp.ne.s32.totalorder %s45, %s46
    %p55 = scmp.eq.s32.totalorder %s14, 0
    %p56 = por %p54, %p55
    %p57 = scmp.ne.s32.totalorder %s45, %s46
    %p58 = scmp.eq.s32.totalorder %s15, 1
    %p59 = por %p57, %p58
    %p61 = scmp.ne.s32.totalorder %s46, %s60
    %p62 = scmp.eq.s32.totalorder %s15, 0
    %p63 = por %p61, %p62
    %s65 = sadd.s32 %s64, 1
    %p68 = scmp.eq.s32.totalorder %s9, 1
    %p69 = scmp.ne.s32.totalorder %s64, %s66
    %p70 = scmp.eq.s32.totalorder %s9, 0
    %p71 = por %p69, %p70
    %p72 = scmp.ne.s32.totalorder %s64, %s66
    %p73 = scmp.eq.s32.totalorder %s14, 1
    %p74 = por %p72, %p73
    %p75 = scmp.ne.s32.totalorder %s66, %s67
    %p76 = scmp.eq.s32.totalorder %s14, 0
    %p77 = por %p75, %p76
    %p78 = scmp.ne.s32.totalorder %s66, %s67
    %p79 = scmp.eq.s32.totalorder %s15, 1
    %p80 = por %p78, %p79
    %p82 = scmp.ne.s32.totalorder %s67, %s81
    %p83 = scmp.eq.s32.totalorder %s15, 0
    %p84 = por %p82, %p83
    %s85 = ssub.s32 %s9, %s16
    %p86 = scmp.eq.s32.totalorder %s85, 0
    %s88 = sadd.s32 %s87, 1
    %s89 = scalar_select %p86, %s87, %s88
    %p92 = pneg %p86
    %p93 = scmp.eq.s32.totalorder %s9, 1
    %p94 = por %p92, %p93
    %p95 = scmp.ne.s32.totalorder %s87, %s90
    %p96 = scmp.eq.s32.totalorder %s9, 0
    %p97 = por %p95, %p96
    %p98 = scmp.ne.s32.totalorder %s87, %s90
    %p99 = scmp.eq.s32.totalorder %s14, 1
    %p100 = por %p98, %p99
    %p101 = scmp.ne.s32.totalorder %s90, %s91
    %p102 = scmp.eq.s32.totalorder %s14, 0
    %p103 = por %p101, %p102
    %p104 = scmp.ne.s32.totalorder %s90, %s91
    %p105 = scmp.eq.s32.totalorder %s15, 1
    %p106 = por %p104, %p105
    %p108 = scmp.ne.s32.totalorder %s91, %s107
    %p109 = scmp.eq.s32.totalorder %s15, 0
    %p110 = por %p108, %p109
    %p111 = scmp.le.s32.totalorder 1, %s9
    %p112 = scmp.lt.s32.totalorder %s9, 3
    %p113 = pnand %p111, %p112
    %p114 = pneg %p113
    // Predicated region
    $region9: #{tpu_custom_call.1} parent=5 // pred_check
      _
    $region10: #{tpu_custom_call.1} parent=5 // pred_check_branch
      %116 = sbr.rel (%p113) target = $region12
    $region11: #{tpu_custom_call.1} parent=5 // pred_region
      %s117 = ssub.s32 %s9, 1
      // Predicated region
      $region13: #{tpu_custom_call.1} parent=11 // pred_check
        %p118 = pneg %p56
      $region14: #{tpu_custom_call.1} parent=11 // pred_check_branch
        %120 = sbr.rel (%p118) target = $region16
      $region15: #{tpu_custom_call.1} parent=11 // pred_region
        _
      $region16: #{tpu_custom_call.1} parent=11 // pred_fallthru
        _
      // Predicated region
      $region17: #{tpu_custom_call.1} parent=11 // pred_check
        %p121 = pneg %p77
      $region18: #{tpu_custom_call.1} parent=11 // pred_check_branch
        %123 = sbr.rel (%p121) target = $region20
      $region19: #{tpu_custom_call.1} parent=11 // pred_region
        _
      $region20: #{tpu_custom_call.1} parent=11 // pred_fallthru
        _
    $region12: #{tpu_custom_call.1} parent=5 // pred_fallthru
      _
    %p124 = scmp.lt.s32.totalorder %s9, 2
    // Predicated region
    $region21: #{tpu_custom_call.1} parent=5 // pred_check
      %p125 = pneg %p124
    $region22: #{tpu_custom_call.1} parent=5 // pred_check_branch
      %127 = sbr.rel (%p125) target = $region24
    $region23: #{tpu_custom_call.1} parent=5 // pred_region
      // Predicated region
      $region25: #{tpu_custom_call.1} parent=23 // pred_check
        %p128 = pneg %p29
      $region26: #{tpu_custom_call.1} parent=23 // pred_check_branch
        %130 = sbr.rel (%p128) target = $region28
      $region27: #{tpu_custom_call.1} parent=23 // pred_region
        %s131 = smul.u32 8, %s9
        %p132 = scmp.lt.s32.totalorder %s131, 15
        %s133 = scalar_select %p132, %s131, 15
        %s134 = smul.addr %s133, 8
        %s135 = smul.addr %s134, 8
        %s136 = scalar_lea.vmem %s0, %s135
        %s137 = smul.u32 8, %s9
      $region28: #{tpu_custom_call.1} parent=23 // pred_fallthru
        _
    $region24: #{tpu_custom_call.1} parent=5 // pred_fallthru
      _
    %p138 = scmp.le.s32.totalorder 1, %s9
    %p139 = scmp.lt.s32.totalorder %s9, 3
    %p140 = pnand %p138, %p139
    %p141 = pneg %p140
    // Predicated region
    $region29: #{tpu_custom_call.1} parent=5 // pred_check
      _
    $region30: #{tpu_custom_call.1} parent=5 // pred_check_branch
      %143 = sbr.rel (%p140) target = $region32
    $region31: #{tpu_custom_call.1} parent=5 // pred_region
      %s144 = ssub.s32 %s9, 1
      %s145 = smul.u32 8, %s14
      %p146 = scmp.lt.s32.totalorder %s145, 15
      %s147 = scalar_select %p146, %s145, 15
      %s148 = smul.addr %s147, 8
      %s149 = smul.addr %s148, 8
      %s150 = scalar_lea.vmem %s0, %s149
      %p151 = pneg %p35
      %p152 = pneg %p32
      %p153 = pneg %p56
      %p154 = pneg %p53
      %p155 = pneg %p77
      %p156 = pneg %p74
      %p157 = pneg %p103
      %p158 = pneg %p100
      %s159 = smul.u32 64, %s14
      %p160 = scmp.lt.s32.totalorder %s159, 127
      %s161 = scalar_select %p160, %s159, 127
      %s162 = smul.addr %s161, 8
      %s163 = scalar_lea.vmem %s3, %s162
      %s164 = smul.u32 8, %s14
      %p165 = scmp.lt.s32.totalorder %s164, 15
      %s166 = scalar_select %p165, %s164, 15
      %s167 = smul.addr %s166, 8
      %s168 = smul.addr %s167, 8
      %s169 = scalar_lea.vmem %s0, %s168
      %s170 = smul.u32 8, %s14
      %s171 = smul.u32 64, %s14
      %p172 = scmp.lt.s32.totalorder %s171, 127
      %s173 = scalar_select %p172, %s171, 127
      %s174 = smul.addr %s173, 8
      %s175 = scalar_lea.vmem %s3, %s174
      %s176 = smul.u32 64, %s14
      %v177 = vld [vmem:[%s169] sm:$0xff]
      %v178 = vld [vmem:[%s169 + $0x8] sm:$0xff]
      %v179 = vld [vmem:[%s169 + $0x10] sm:$0xff]
      %v180 = vld [vmem:[%s169 + $0x18] sm:$0xff]
      %v181 = vld [vmem:[%s169 + $0x20] sm:$0xff]
      %v182 = vld [vmem:[%s169 + $0x28] sm:$0xff]
      %v183 = vld [vmem:[%s169 + $0x30] sm:$0xff]
      %v184 = vld [vmem:[%s169 + $0x38] sm:$0xff]
      %v185 = vld [vmem:[%s169 + $0x40] sm:$0xff]
      %v186 = vld [vmem:[%s169 + $0x48] sm:$0xff]
      %v187 = vld [vmem:[%s169 + $0x50] sm:$0xff]
      %v188 = vld [vmem:[%s169 + $0x58] sm:$0xff]
      %v189 = vld [vmem:[%s169 + $0x60] sm:$0xff]
      %v190 = vld [vmem:[%s169 + $0x68] sm:$0xff]
      %v191 = vld [vmem:[%s169 + $0x70] sm:$0xff]
      %v192 = vld [vmem:[%s169 + $0x78] sm:$0xff]
      %v193 = vld [vmem:[%s169 + $0x80] sm:$0xff]
      %v194 = vld [vmem:[%s169 + $0x88] sm:$0xff]
      %v195 = vld [vmem:[%s169 + $0x90] sm:$0xff]
      %v196 = vld [vmem:[%s169 + $0x98] sm:$0xff]
      %v197 = vld [vmem:[%s169 + $0xa0] sm:$0xff]
      %v198 = vld [vmem:[%s169 + $0xa8] sm:$0xff]
      %v199 = vld [vmem:[%s169 + $0xb0] sm:$0xff]
      %v200 = vld [vmem:[%s169 + $0xb8] sm:$0xff]
      %v201 = vld [vmem:[%s169 + $0xc0] sm:$0xff]
      %v202 = vld [vmem:[%s169 + $0xc8] sm:$0xff]
      %v203 = vld [vmem:[%s169 + $0xd0] sm:$0xff]
      %v204 = vld [vmem:[%s169 + $0xd8] sm:$0xff]
      %v205 = vld [vmem:[%s169 + $0xe0] sm:$0xff]
      %v206 = vld [vmem:[%s169 + $0xe8] sm:$0xff]
      %v207 = vld [vmem:[%s169 + $0xf0] sm:$0xff]
      %v208 = vld [vmem:[%s169 + $0xf8] sm:$0xff]
      %v209 = vld [vmem:[%s169 + $0x100] sm:$0xff]
      %v210 = vld [vmem:[%s169 + $0x108] sm:$0xff]
      %v211 = vld [vmem:[%s169 + $0x110] sm:$0xff]
      %v212 = vld [vmem:[%s169 + $0x118] sm:$0xff]
      %v213 = vld [vmem:[%s169 + $0x120] sm:$0xff]
      %v214 = vld [vmem:[%s169 + $0x128] sm:$0xff]
      %v215 = vld [vmem:[%s169 + $0x130] sm:$0xff]
      %v216 = vld [vmem:[%s169 + $0x138] sm:$0xff]
      %v217 = vld [vmem:[%s169 + $0x140] sm:$0xff]
      %v218 = vld [vmem:[%s169 + $0x148] sm:$0xff]
      %v219 = vld [vmem:[%s169 + $0x150] sm:$0xff]
      %v220 = vld [vmem:[%s169 + $0x158] sm:$0xff]
      %v221 = vld [vmem:[%s169 + $0x160] sm:$0xff]
      %v222 = vld [vmem:[%s169 + $0x168] sm:$0xff]
      %v223 = vld [vmem:[%s169 + $0x170] sm:$0xff]
      %v224 = vld [vmem:[%s169 + $0x178] sm:$0xff]
      %v225 = vld [vmem:[%s169 + $0x180] sm:$0xff]
      %v226 = vld [vmem:[%s169 + $0x188] sm:$0xff]
      %v227 = vld [vmem:[%s169 + $0x190] sm:$0xff]
      %v228 = vld [vmem:[%s169 + $0x198] sm:$0xff]
      %v229 = vld [vmem:[%s169 + $0x1a0] sm:$0xff]
      %v230 = vld [vmem:[%s169 + $0x1a8] sm:$0xff]
      %v231 = vld [vmem:[%s169 + $0x1b0] sm:$0xff]
      %v232 = vld [vmem:[%s169 + $0x1b8] sm:$0xff]
      %v233 = vld [vmem:[%s169 + $0x1c0] sm:$0xff]
      %v234 = vld [vmem:[%s169 + $0x1c8] sm:$0xff]
      %v235 = vld [vmem:[%s169 + $0x1d0] sm:$0xff]
      %v236 = vld [vmem:[%s169 + $0x1d8] sm:$0xff]
      %v237 = vld [vmem:[%s169 + $0x1e0] sm:$0xff]
      %v238 = vld [vmem:[%s169 + $0x1e8] sm:$0xff]
      %v239 = vld [vmem:[%s169 + $0x1f0] sm:$0xff]
      %v240 = vld [vmem:[%s169 + $0x1f8] sm:$0xff]
      %v241 = vld [vmem:[%s1] sm:$0xff]
      %v242 = vld [vmem:[%s2] sm:$0x1]
      %v244 = vlaneseq
      %v245 = vshrl.u32 %v244, 7
      %v246 = vsub.s32 0, %v245
      %v247 = vrot.slane %v242, %v246
      %vm249 = vcmask 64512
      %v251 = vsel %vm249, %v177, 0
      %v254 = vsel %vm249, %v178, 0
      %v257 = vsel %vm249, %v179, 0
      %v260 = vsel %vm249, %v180, 0
      %v263 = vsel %vm249, %v181, 0
      %v266 = vsel %vm249, %v182, 0
      %v269 = vsel %vm249, %v183, 0
      %v272 = vsel %vm249, %v184, 0
      %v275 = vsel %vm249, %v185, 0
      %v278 = vsel %vm249, %v186, 0
      %v281 = vsel %vm249, %v187, 0
      %v284 = vsel %vm249, %v188, 0
      %v287 = vsel %vm249, %v189, 0
      %v290 = vsel %vm249, %v190, 0
      %v293 = vsel %vm249, %v191, 0
      %v296 = vsel %vm249, %v192, 0
      %v299 = vsel %vm249, %v193, 0
      %v302 = vsel %vm249, %v194, 0
      %v305 = vsel %vm249, %v195, 0
      %v308 = vsel %vm249, %v196, 0
      %v311 = vsel %vm249, %v197, 0
      %v314 = vsel %vm249, %v198, 0
      %v317 = vsel %vm249, %v199, 0
      %v320 = vsel %vm249, %v200, 0
      %v323 = vsel %vm249, %v201, 0
      %v326 = vsel %vm249, %v202, 0
      %v329 = vsel %vm249, %v203, 0
      %v332 = vsel %vm249, %v204, 0
      %v335 = vsel %vm249, %v205, 0
      %v338 = vsel %vm249, %v206, 0
      %v341 = vsel %vm249, %v207, 0
      %v344 = vsel %vm249, %v208, 0
      %v347 = vsel %vm249, %v209, 0
      %v350 = vsel %vm249, %v210, 0
      %v353 = vsel %vm249, %v211, 0
      %v356 = vsel %vm249, %v212, 0
      %v359 = vsel %vm249, %v213, 0
      %v362 = vsel %vm249, %v214, 0
      %v365 = vsel %vm249, %v215, 0
      %v368 = vsel %vm249, %v216, 0
      %v371 = vsel %vm249, %v217, 0
      %v374 = vsel %vm249, %v218, 0
      %v377 = vsel %vm249, %v219, 0
      %v380 = vsel %vm249, %v220, 0
      %v383 = vsel %vm249, %v221, 0
      %v386 = vsel %vm249, %v222, 0
      %v389 = vsel %vm249, %v223, 0
      %v392 = vsel %vm249, %v224, 0
      %v395 = vsel %vm249, %v225, 0
      %v398 = vsel %vm249, %v226, 0
      %v401 = vsel %vm249, %v227, 0
      %v404 = vsel %vm249, %v228, 0
      %v407 = vsel %vm249, %v229, 0
      %v410 = vsel %vm249, %v230, 0
      %v413 = vsel %vm249, %v231, 0
      %v416 = vsel %vm249, %v232, 0
      %v419 = vsel %vm249, %v233, 0
      %v422 = vsel %vm249, %v234, 0
      %v425 = vsel %vm249, %v235, 0
      %v428 = vsel %vm249, %v236, 0
      %v431 = vsel %vm249, %v237, 0
      %v434 = vsel %vm249, %v238, 0
      %v437 = vsel %vm249, %v239, 0
      %v440 = vsel %vm249, %v240, 0
      %442 = vmatprep.subr.mxu0 0.0
      %443 = vmatpush1.msra.mxu0 0.0
      %444 = vmatprep.subr.mxu0 0.0
      %445 = vmatpush1.msra.mxu0 0.0
      %446 = vmatprep.subr.mxu0 0.0
      %447 = vmatpush1.msra.mxu0 0.0
      %448 = vmatprep.subr.mxu0 0.0
      %449 = vmatpush1.msra.mxu0 0.0
      %450 = vmatprep.subr.mxu0 0.0
      %451 = vmatpush1.msra.mxu0 0.0
      %452 = vmatprep.subr.mxu0 0.0
      %453 = vmatpush1.msra.mxu0 0.0
      %454 = vmatprep.subr.mxu0 0.0
      %455 = vmatpush1.msra.mxu0 0.0
      %456 = vmatprep.subr.mxu0 0.0
      %457 = vmatpush1.msra.mxu0 0.0
      %458 = vmatprep.subr.mxu0 0.0
      %459 = vmatpush1.msra.mxu0 0.0
      %460 = vmatprep.subr.mxu0 0.0
      %461 = vmatpush1.msra.mxu0 0.0
      %462 = vmatprep.subr.mxu0 0.0
      %463 = vmatpush1.msra.mxu0 0.0
      %464 = vmatprep.subr.mxu0 0.0
      %465 = vmatpush1.msra.mxu0 0.0
      %466 = vmatprep.subr.mxu0 0.0
      %467 = vmatpush1.msra.mxu0 0.0
      %468 = vmatprep.subr.mxu0 0.0
      %469 = vmatpush1.msra.mxu0 0.0
      %470 = vmatprep.subr.mxu0 0.0
      %471 = vmatpush1.msra.mxu0 0.0
      %472 = vmatprep.subr.mxu0 0.0
      %473 = vmatpush1.msra.mxu0 %v241
      %474 = vmatprep.subr.mxu0 0.0
      %475 = vmatpush2.msra.mxu0 0.0
      %476 = vmatprep.subr.mxu0 0.0
      %477 = vmatpush2.msra.mxu0 0.0
      %478 = vmatprep.subr.mxu0 0.0
      %479 = vmatpush2.msra.mxu0 0.0
      %480 = vmatprep.subr.mxu0 0.0
      %481 = vmatpush2.msra.mxu0 0.0
      %482 = vmatprep.subr.mxu0 0.0
      %483 = vmatpush2.msra.mxu0 0.0
      %484 = vmatprep.subr.mxu0 0.0
      %485 = vmatpush2.msra.mxu0 0.0
      %486 = vmatprep.subr.mxu0 0.0
      %487 = vmatpush2.msra.mxu0 0.0
      %488 = vmatprep.subr.mxu0 0.0
      %489 = vmatpush2.msra.mxu0 0.0
      %490 = vmatprep.subr.mxu0 0.0
      %491 = vmatpush2.msra.mxu0 0.0
      %492 = vmatprep.subr.mxu0 0.0
      %493 = vmatpush2.msra.mxu0 0.0
      %494 = vmatprep.subr.mxu0 0.0
      %495 = vmatpush2.msra.mxu0 0.0
      %496 = vmatprep.subr.mxu0 0.0
      %497 = vmatpush2.msra.mxu0 0.0
      %498 = vmatprep.subr.mxu0 0.0
      %499 = vmatpush2.msra.mxu0 0.0
      %500 = vmatprep.subr.mxu0 0.0
      %501 = vmatpush2.msra.mxu0 0.0
      %502 = vmatprep.subr.mxu0 0.0
      %503 = vmatpush2.msra.mxu0 0.0
      %504 = vmatprep.subr.mxu0 0.0
      %505 = vmatpush2.msra.mxu0 0.0
      %506 = vmatprep.mubr.f32.mxu0 0.0
      %507 = vmatmul.mubr.f32.gmra.mxu0 %v251
      %v508 = vpop.f32.mrf.mxu0
      %v509 = vadd.f32 %v247, %v508
      %v510 = vpop.f32.mrf.mxu0
      %511 = vmatprep.mubr.f32.mxu0 0.0
      %512 = vmatmul.mubr.f32.gmra.mxu0 %v254
      %v513 = vpop.f32.mrf.mxu0
      %v514 = vadd.f32 %v247, %v513
      %v515 = vpop.f32.mrf.mxu0
      %516 = vmatprep.mubr.f32.mxu0 0.0
      %517 = vmatmul.mubr.f32.gmra.mxu0 %v257
      %v518 = vpop.f32.mrf.mxu0
      %v519 = vadd.f32 %v247, %v518
      %v520 = vpop.f32.mrf.mxu0
      %521 = vmatprep.mubr.f32.mxu0 0.0
      %522 = vmatmul.mubr.f32.gmra.mxu0 %v260
      %v523 = vpop.f32.mrf.mxu0
      %v524 = vadd.f32 %v247, %v523
      %v525 = vpop.f32.mrf.mxu0
      %526 = vmatprep.mubr.f32.mxu0 0.0
      %527 = vmatmul.mubr.f32.gmra.mxu0 %v263
      %v528 = vpop.f32.mrf.mxu0
      %v529 = vadd.f32 %v247, %v528
      %v530 = vpop.f32.mrf.mxu0
      %531 = vmatprep.mubr.f32.mxu0 0.0
      %532 = vmatmul.mubr.f32.gmra.mxu0 %v266
      %v533 = vpop.f32.mrf.mxu0
      %v534 = vadd.f32 %v247, %v533
      %v535 = vpop.f32.mrf.mxu0
      %536 = vmatprep.mubr.f32.mxu0 0.0
      %537 = vmatmul.mubr.f32.gmra.mxu0 %v269
      %v538 = vpop.f32.mrf.mxu0
      %v539 = vadd.f32 %v247, %v538
      %v540 = vpop.f32.mrf.mxu0
      %541 = vmatprep.mubr.f32.mxu0 0.0
      %542 = vmatmul.mubr.f32.gmra.mxu0 %v272
      %v543 = vpop.f32.mrf.mxu0
      %v544 = vadd.f32 %v247, %v543
      %v545 = vpop.f32.mrf.mxu0
      %546 = vmatprep.mubr.f32.mxu0 0.0
      %547 = vmatmul.mubr.f32.gmra.mxu0 %v275
      %v548 = vpop.f32.mrf.mxu0
      %v549 = vadd.f32 %v247, %v548
      %v550 = vpop.f32.mrf.mxu0
      %551 = vmatprep.mubr.f32.mxu0 0.0
      %552 = vmatmul.mubr.f32.gmra.mxu0 %v278
      %v553 = vpop.f32.mrf.mxu0
      %v554 = vadd.f32 %v247, %v553
      %v555 = vpop.f32.mrf.mxu0
      %556 = vmatprep.mubr.f32.mxu0 0.0
      %557 = vmatmul.mubr.f32.gmra.mxu0 %v281
      %v558 = vpop.f32.mrf.mxu0
      %v559 = vadd.f32 %v247, %v558
      %v560 = vpop.f32.mrf.mxu0
      %561 = vmatprep.mubr.f32.mxu0 0.0
      %562 = vmatmul.mubr.f32.gmra.mxu0 %v284
      %v563 = vpop.f32.mrf.mxu0
      %v564 = vadd.f32 %v247, %v563
      %v565 = vpop.f32.mrf.mxu0
      %566 = vmatprep.mubr.f32.mxu0 0.0
      %567 = vmatmul.mubr.f32.gmra.mxu0 %v287
      %v568 = vpop.f32.mrf.mxu0
      %v569 = vadd.f32 %v247, %v568
      %v570 = vpop.f32.mrf.mxu0
      %571 = vmatprep.mubr.f32.mxu0 0.0
      %572 = vmatmul.mubr.f32.gmra.mxu0 %v290
      %v573 = vpop.f32.mrf.mxu0
      %v574 = vadd.f32 %v247, %v573
      %v575 = vpop.f32.mrf.mxu0
      %576 = vmatprep.mubr.f32.mxu0 0.0
      %577 = vmatmul.mubr.f32.gmra.mxu0 %v293
      %v578 = vpop.f32.mrf.mxu0
      %v579 = vadd.f32 %v247, %v578
      %v580 = vpop.f32.mrf.mxu0
      %581 = vmatprep.mubr.f32.mxu0 0.0
      %582 = vmatmul.mubr.f32.gmra.mxu0 %v296
      %v583 = vpop.f32.mrf.mxu0
      %v584 = vadd.f32 %v247, %v583
      %v585 = vpop.f32.mrf.mxu0
      %586 = vmatprep.mubr.f32.mxu0 0.0
      %587 = vmatmul.mubr.f32.gmra.mxu0 %v299
      %v588 = vpop.f32.mrf.mxu0
      %v589 = vadd.f32 %v247, %v588
      %v590 = vpop.f32.mrf.mxu0
      %591 = vmatprep.mubr.f32.mxu0 0.0
      %592 = vmatmul.mubr.f32.gmra.mxu0 %v302
      %v593 = vpop.f32.mrf.mxu0
      %v594 = vadd.f32 %v247, %v593
      %v595 = vpop.f32.mrf.mxu0
      %596 = vmatprep.mubr.f32.mxu0 0.0
      %597 = vmatmul.mubr.f32.gmra.mxu0 %v305
      %v598 = vpop.f32.mrf.mxu0
      %v599 = vadd.f32 %v247, %v598
      %v600 = vpop.f32.mrf.mxu0
      %601 = vmatprep.mubr.f32.mxu0 0.0
      %602 = vmatmul.mubr.f32.gmra.mxu0 %v308
      %v603 = vpop.f32.mrf.mxu0
      %v604 = vadd.f32 %v247, %v603
      %v605 = vpop.f32.mrf.mxu0
      %606 = vmatprep.mubr.f32.mxu0 0.0
      %607 = vmatmul.mubr.f32.gmra.mxu0 %v311
      %v608 = vpop.f32.mrf.mxu0
      %v609 = vadd.f32 %v247, %v608
      %v610 = vpop.f32.mrf.mxu0
      %611 = vmatprep.mubr.f32.mxu0 0.0
      %612 = vmatmul.mubr.f32.gmra.mxu0 %v314
      %v613 = vpop.f32.mrf.mxu0
      %v614 = vadd.f32 %v247, %v613
      %v615 = vpop.f32.mrf.mxu0
      %616 = vmatprep.mubr.f32.mxu0 0.0
      %617 = vmatmul.mubr.f32.gmra.mxu0 %v317
      %v618 = vpop.f32.mrf.mxu0
      %v619 = vadd.f32 %v247, %v618
      %v620 = vpop.f32.mrf.mxu0
      %621 = vmatprep.mubr.f32.mxu0 0.0
      %622 = vmatmul.mubr.f32.gmra.mxu0 %v320
      %v623 = vpop.f32.mrf.mxu0
      %v624 = vadd.f32 %v247, %v623
      %v625 = vpop.f32.mrf.mxu0
      %626 = vmatprep.mubr.f32.mxu0 0.0
      %627 = vmatmul.mubr.f32.gmra.mxu0 %v323
      %v628 = vpop.f32.mrf.mxu0
      %v629 = vadd.f32 %v247, %v628
      %v630 = vpop.f32.mrf.mxu0
      %631 = vmatprep.mubr.f32.mxu0 0.0
      %632 = vmatmul.mubr.f32.gmra.mxu0 %v326
      %v633 = vpop.f32.mrf.mxu0
      %v634 = vadd.f32 %v247, %v633
      %v635 = vpop.f32.mrf.mxu0
      %636 = vmatprep.mubr.f32.mxu0 0.0
      %637 = vmatmul.mubr.f32.gmra.mxu0 %v329
      %v638 = vpop.f32.mrf.mxu0
      %v639 = vadd.f32 %v247, %v638
      %v640 = vpop.f32.mrf.mxu0
      %641 = vmatprep.mubr.f32.mxu0 0.0
      %642 = vmatmul.mubr.f32.gmra.mxu0 %v332
      %v643 = vpop.f32.mrf.mxu0
      %v644 = vadd.f32 %v247, %v643
      %v645 = vpop.f32.mrf.mxu0
      %646 = vmatprep.mubr.f32.mxu0 0.0
      %647 = vmatmul.mubr.f32.gmra.mxu0 %v335
      %v648 = vpop.f32.mrf.mxu0
      %v649 = vadd.f32 %v247, %v648
      %v650 = vpop.f32.mrf.mxu0
      %651 = vmatprep.mubr.f32.mxu0 0.0
      %652 = vmatmul.mubr.f32.gmra.mxu0 %v338
      %v653 = vpop.f32.mrf.mxu0
      %v654 = vadd.f32 %v247, %v653
      %v655 = vpop.f32.mrf.mxu0
      %656 = vmatprep.mubr.f32.mxu0 0.0
      %657 = vmatmul.mubr.f32.gmra.mxu0 %v341
      %v658 = vpop.f32.mrf.mxu0
      %v659 = vadd.f32 %v247, %v658
      %v660 = vpop.f32.mrf.mxu0
      %661 = vmatprep.mubr.f32.mxu0 0.0
      %662 = vmatmul.mubr.f32.gmra.mxu0 %v344
      %v663 = vpop.f32.mrf.mxu0
      %v664 = vadd.f32 %v247, %v663
      %v665 = vpop.f32.mrf.mxu0
      %666 = vmatprep.mubr.f32.mxu0 0.0
      %667 = vmatmul.mubr.f32.gmra.mxu0 %v347
      %v668 = vpop.f32.mrf.mxu0
      %v669 = vadd.f32 %v247, %v668
      %v670 = vpop.f32.mrf.mxu0
      %671 = vmatprep.mubr.f32.mxu0 0.0
      %672 = vmatmul.mubr.f32.gmra.mxu0 %v350
      %v673 = vpop.f32.mrf.mxu0
      %v674 = vadd.f32 %v247, %v673
      %v675 = vpop.f32.mrf.mxu0
      %676 = vmatprep.mubr.f32.mxu0 0.0
      %677 = vmatmul.mubr.f32.gmra.mxu0 %v353
      %v678 = vpop.f32.mrf.mxu0
      %v679 = vadd.f32 %v247, %v678
      %v680 = vpop.f32.mrf.mxu0
      %681 = vmatprep.mubr.f32.mxu0 0.0
      %682 = vmatmul.mubr.f32.gmra.mxu0 %v356
      %v683 = vpop.f32.mrf.mxu0
      %v684 = vadd.f32 %v247, %v683
      %v685 = vpop.f32.mrf.mxu0
      %686 = vmatprep.mubr.f32.mxu0 0.0
      %687 = vmatmul.mubr.f32.gmra.mxu0 %v359
      %v688 = vpop.f32.mrf.mxu0
      %v689 = vadd.f32 %v247, %v688
      %v690 = vpop.f32.mrf.mxu0
      %691 = vmatprep.mubr.f32.mxu0 0.0
      %692 = vmatmul.mubr.f32.gmra.mxu0 %v362
      %v693 = vpop.f32.mrf.mxu0
      %v694 = vadd.f32 %v247, %v693
      %v695 = vpop.f32.mrf.mxu0
      %696 = vmatprep.mubr.f32.mxu0 0.0
      %697 = vmatmul.mubr.f32.gmra.mxu0 %v365
      %v698 = vpop.f32.mrf.mxu0
      %v699 = vadd.f32 %v247, %v698
      %v700 = vpop.f32.mrf.mxu0
      %701 = vmatprep.mubr.f32.mxu0 0.0
      %702 = vmatmul.mubr.f32.gmra.mxu0 %v368
      %v703 = vpop.f32.mrf.mxu0
      %v704 = vadd.f32 %v247, %v703
      %v705 = vpop.f32.mrf.mxu0
      %706 = vmatprep.mubr.f32.mxu0 0.0
      %707 = vmatmul.mubr.f32.gmra.mxu0 %v371
      %v708 = vpop.f32.mrf.mxu0
      %v709 = vadd.f32 %v247, %v708
      %v710 = vpop.f32.mrf.mxu0
      %711 = vmatprep.mubr.f32.mxu0 0.0
      %712 = vmatmul.mubr.f32.gmra.mxu0 %v374
      %v713 = vpop.f32.mrf.mxu0
      %v714 = vadd.f32 %v247, %v713
      %v715 = vpop.f32.mrf.mxu0
      %716 = vmatprep.mubr.f32.mxu0 0.0
      %717 = vmatmul.mubr.f32.gmra.mxu0 %v377
      %v718 = vpop.f32.mrf.mxu0
      %v719 = vadd.f32 %v247, %v718
      %v720 = vpop.f32.mrf.mxu0
      %721 = vmatprep.mubr.f32.mxu0 0.0
      %722 = vmatmul.mubr.f32.gmra.mxu0 %v380
      %v723 = vpop.f32.mrf.mxu0
      %v724 = vadd.f32 %v247, %v723
      %v725 = vpop.f32.mrf.mxu0
      %726 = vmatprep.mubr.f32.mxu0 0.0
      %727 = vmatmul.mubr.f32.gmra.mxu0 %v383
      %v728 = vpop.f32.mrf.mxu0
      %v729 = vadd.f32 %v247, %v728
      %v730 = vpop.f32.mrf.mxu0
      %731 = vmatprep.mubr.f32.mxu0 0.0
      %732 = vmatmul.mubr.f32.gmra.mxu0 %v386
      %v733 = vpop.f32.mrf.mxu0
      %v734 = vadd.f32 %v247, %v733
      %v735 = vpop.f32.mrf.mxu0
      %736 = vmatprep.mubr.f32.mxu0 0.0
      %737 = vmatmul.mubr.f32.gmra.mxu0 %v389
      %v738 = vpop.f32.mrf.mxu0
      %v739 = vadd.f32 %v247, %v738
      %v740 = vpop.f32.mrf.mxu0
      %741 = vmatprep.mubr.f32.mxu0 0.0
      %742 = vmatmul.mubr.f32.gmra.mxu0 %v392
      %v743 = vpop.f32.mrf.mxu0
      %v744 = vadd.f32 %v247, %v743
      %v745 = vpop.f32.mrf.mxu0
      %746 = vmatprep.mubr.f32.mxu0 0.0
      %747 = vmatmul.mubr.f32.gmra.mxu0 %v395
      %v748 = vpop.f32.mrf.mxu0
      %v749 = vadd.f32 %v247, %v748
      %v750 = vpop.f32.mrf.mxu0
      %751 = vmatprep.mubr.f32.mxu0 0.0
      %752 = vmatmul.mubr.f32.gmra.mxu0 %v398
      %v753 = vpop.f32.mrf.mxu0
      %v754 = vadd.f32 %v247, %v753
      %v755 = vpop.f32.mrf.mxu0
      %756 = vmatprep.mubr.f32.mxu0 0.0
      %757 = vmatmul.mubr.f32.gmra.mxu0 %v401
      %v758 = vpop.f32.mrf.mxu0
      %v759 = vadd.f32 %v247, %v758
      %v760 = vpop.f32.mrf.mxu0
      %761 = vmatprep.mubr.f32.mxu0 0.0
      %762 = vmatmul.mubr.f32.gmra.mxu0 %v404
      %v763 = vpop.f32.mrf.mxu0
      %v764 = vadd.f32 %v247, %v763
      %v765 = vpop.f32.mrf.mxu0
      %766 = vmatprep.mubr.f32.mxu0 0.0
      %767 = vmatmul.mubr.f32.gmra.mxu0 %v407
      %v768 = vpop.f32.mrf.mxu0
      %v769 = vadd.f32 %v247, %v768
      %v770 = vpop.f32.mrf.mxu0
      %771 = vmatprep.mubr.f32.mxu0 0.0
      %772 = vmatmul.mubr.f32.gmra.mxu0 %v410
      %v773 = vpop.f32.mrf.mxu0
      %v774 = vadd.f32 %v247, %v773
      %v775 = vpop.f32.mrf.mxu0
      %776 = vmatprep.mubr.f32.mxu0 0.0
      %777 = vmatmul.mubr.f32.gmra.mxu0 %v413
      %v778 = vpop.f32.mrf.mxu0
      %v779 = vadd.f32 %v247, %v778
      %v780 = vpop.f32.mrf.mxu0
      %781 = vmatprep.mubr.f32.mxu0 0.0
      %782 = vmatmul.mubr.f32.gmra.mxu0 %v416
      %v783 = vpop.f32.mrf.mxu0
      %v784 = vadd.f32 %v247, %v783
      %v785 = vpop.f32.mrf.mxu0
      %786 = vmatprep.mubr.f32.mxu0 0.0
      %787 = vmatmul.mubr.f32.gmra.mxu0 %v419
      %v788 = vpop.f32.mrf.mxu0
      %v789 = vadd.f32 %v247, %v788
      %v790 = vpop.f32.mrf.mxu0
      %791 = vmatprep.mubr.f32.mxu0 0.0
      %792 = vmatmul.mubr.f32.gmra.mxu0 %v422
      %v793 = vpop.f32.mrf.mxu0
      %v794 = vadd.f32 %v247, %v793
      %v795 = vpop.f32.mrf.mxu0
      %796 = vmatprep.mubr.f32.mxu0 0.0
      %797 = vmatmul.mubr.f32.gmra.mxu0 %v425
      %v798 = vpop.f32.mrf.mxu0
      %v799 = vadd.f32 %v247, %v798
      %v800 = vpop.f32.mrf.mxu0
      %801 = vmatprep.mubr.f32.mxu0 0.0
      %802 = vmatmul.mubr.f32.gmra.mxu0 %v428
      %v803 = vpop.f32.mrf.mxu0
      %v804 = vadd.f32 %v247, %v803
      %v805 = vpop.f32.mrf.mxu0
      %806 = vmatprep.mubr.f32.mxu0 0.0
      %807 = vmatmul.mubr.f32.gmra.mxu0 %v431
      %v808 = vpop.f32.mrf.mxu0
      %v809 = vadd.f32 %v247, %v808
      %v810 = vpop.f32.mrf.mxu0
      %811 = vmatprep.mubr.f32.mxu0 0.0
      %812 = vmatmul.mubr.f32.gmra.mxu0 %v434
      %v813 = vpop.f32.mrf.mxu0
      %v814 = vadd.f32 %v247, %v813
      %v815 = vpop.f32.mrf.mxu0
      %816 = vmatprep.mubr.f32.mxu0 0.0
      %817 = vmatmul.mubr.f32.gmra.mxu0 %v437
      %v818 = vpop.f32.mrf.mxu0
      %v819 = vadd.f32 %v247, %v818
      %v820 = vpop.f32.mrf.mxu0
      %821 = vmatprep.mubr.f32.mxu0 0.0
      %822 = vmatmul.mubr.f32.gmra.mxu0 %v440
      %v823 = vpop.f32.mrf.mxu0
      %v824 = vadd.f32 %v247, %v823
      %v825 = vpop.f32.mrf.mxu0
      %826 = vdwg.mxu0
      %vm827 = vcmask 130048
      %828 = vst.msk [vmem:[%s175] sm:$0xff] %vm827, %v509
      %829 = vst.msk [vmem:[%s175 + $0x8] sm:$0xff] %vm827, %v514
      %830 = vst.msk [vmem:[%s175 + $0x10] sm:$0xff] %vm827, %v519
      %831 = vst.msk [vmem:[%s175 + $0x18] sm:$0xff] %vm827, %v524
      %832 = vst.msk [vmem:[%s175 + $0x20] sm:$0xff] %vm827, %v529
      %833 = vst.msk [vmem:[%s175 + $0x28] sm:$0xff] %vm827, %v534
      %834 = vst.msk [vmem:[%s175 + $0x30] sm:$0xff] %vm827, %v539
      %835 = vst.msk [vmem:[%s175 + $0x38] sm:$0xff] %vm827, %v544
      %836 = vst.msk [vmem:[%s175 + $0x40] sm:$0xff] %vm827, %v549
      %837 = vst.msk [vmem:[%s175 + $0x48] sm:$0xff] %vm827, %v554
      %838 = vst.msk [vmem:[%s175 + $0x50] sm:$0xff] %vm827, %v559
      %839 = vst.msk [vmem:[%s175 + $0x58] sm:$0xff] %vm827, %v564
      %840 = vst.msk [vmem:[%s175 + $0x60] sm:$0xff] %vm827, %v569
      %841 = vst.msk [vmem:[%s175 + $0x68] sm:$0xff] %vm827, %v574
      %842 = vst.msk [vmem:[%s175 + $0x70] sm:$0xff] %vm827, %v579
      %843 = vst.msk [vmem:[%s175 + $0x78] sm:$0xff] %vm827, %v584
      %844 = vst.msk [vmem:[%s175 + $0x80] sm:$0xff] %vm827, %v589
      %845 = vst.msk [vmem:[%s175 + $0x88] sm:$0xff] %vm827, %v594
      %846 = vst.msk [vmem:[%s175 + $0x90] sm:$0xff] %vm827, %v599
      %847 = vst.msk [vmem:[%s175 + $0x98] sm:$0xff] %vm827, %v604
      %848 = vst.msk [vmem:[%s175 + $0xa0] sm:$0xff] %vm827, %v609
      %849 = vst.msk [vmem:[%s175 + $0xa8] sm:$0xff] %vm827, %v614
      %850 = vst.msk [vmem:[%s175 + $0xb0] sm:$0xff] %vm827, %v619
      %851 = vst.msk [vmem:[%s175 + $0xb8] sm:$0xff] %vm827, %v624
      %852 = vst.msk [vmem:[%s175 + $0xc0] sm:$0xff] %vm827, %v629
      %853 = vst.msk [vmem:[%s175 + $0xc8] sm:$0xff] %vm827, %v634
      %854 = vst.msk [vmem:[%s175 + $0xd0] sm:$0xff] %vm827, %v639
      %855 = vst.msk [vmem:[%s175 + $0xd8] sm:$0xff] %vm827, %v644
      %856 = vst.msk [vmem:[%s175 + $0xe0] sm:$0xff] %vm827, %v649
      %857 = vst.msk [vmem:[%s175 + $0xe8] sm:$0xff] %vm827, %v654
      %858 = vst.msk [vmem:[%s175 + $0xf0] sm:$0xff] %vm827, %v659
      %859 = vst.msk [vmem:[%s175 + $0xf8] sm:$0xff] %vm827, %v664
      %860 = vst.msk [vmem:[%s175 + $0x100] sm:$0xff] %vm827, %v669
      %861 = vst.msk [vmem:[%s175 + $0x108] sm:$0xff] %vm827, %v674
      %862 = vst.msk [vmem:[%s175 + $0x110] sm:$0xff] %vm827, %v679
      %863 = vst.msk [vmem:[%s175 + $0x118] sm:$0xff] %vm827, %v684
      %864 = vst.msk [vmem:[%s175 + $0x120] sm:$0xff] %vm827, %v689
      %865 = vst.msk [vmem:[%s175 + $0x128] sm:$0xff] %vm827, %v694
      %866 = vst.msk [vmem:[%s175 + $0x130] sm:$0xff] %vm827, %v699
      %867 = vst.msk [vmem:[%s175 + $0x138] sm:$0xff] %vm827, %v704
      %868 = vst.msk [vmem:[%s175 + $0x140] sm:$0xff] %vm827, %v709
      %869 = vst.msk [vmem:[%s175 + $0x148] sm:$0xff] %vm827, %v714
      %870 = vst.msk [vmem:[%s175 + $0x150] sm:$0xff] %vm827, %v719
      %871 = vst.msk [vmem:[%s175 + $0x158] sm:$0xff] %vm827, %v724
      %872 = vst.msk [vmem:[%s175 + $0x160] sm:$0xff] %vm827, %v729
      %873 = vst.msk [vmem:[%s175 + $0x168] sm:$0xff] %vm827, %v734
      %874 = vst.msk [vmem:[%s175 + $0x170] sm:$0xff] %vm827, %v739
      %875 = vst.msk [vmem:[%s175 + $0x178] sm:$0xff] %vm827, %v744
      %876 = vst.msk [vmem:[%s175 + $0x180] sm:$0xff] %vm827, %v749
      %877 = vst.msk [vmem:[%s175 + $0x188] sm:$0xff] %vm827, %v754
      %878 = vst.msk [vmem:[%s175 + $0x190] sm:$0xff] %vm827, %v759
      %879 = vst.msk [vmem:[%s175 + $0x198] sm:$0xff] %vm827, %v764
      %880 = vst.msk [vmem:[%s175 + $0x1a0] sm:$0xff] %vm827, %v769
      %881 = vst.msk [vmem:[%s175 + $0x1a8] sm:$0xff] %vm827, %v774
      %882 = vst.msk [vmem:[%s175 + $0x1b0] sm:$0xff] %vm827, %v779
      %883 = vst.msk [vmem:[%s175 + $0x1b8] sm:$0xff] %vm827, %v784
      %884 = vst.msk [vmem:[%s175 + $0x1c0] sm:$0xff] %vm827, %v789
      %885 = vst.msk [vmem:[%s175 + $0x1c8] sm:$0xff] %vm827, %v794
      %886 = vst.msk [vmem:[%s175 + $0x1d0] sm:$0xff] %vm827, %v799
      %887 = vst.msk [vmem:[%s175 + $0x1d8] sm:$0xff] %vm827, %v804
      %888 = vst.msk [vmem:[%s175 + $0x1e0] sm:$0xff] %vm827, %v809
      %889 = vst.msk [vmem:[%s175 + $0x1e8] sm:$0xff] %vm827, %v814
      %890 = vst.msk [vmem:[%s175 + $0x1f0] sm:$0xff] %vm827, %v819
      %891 = vst.msk [vmem:[%s175 + $0x1f8] sm:$0xff] %vm827, %v824
      %s892 = smul.u32 64, %s14
      %p893 = scmp.lt.s32.totalorder %s892, 127
      %s894 = scalar_select %p893, %s892, 127
      %s895 = smul.addr %s894, 8
      %s896 = scalar_lea.vmem %s3, %s895
      // Predicated region
      $region33: #{tpu_custom_call.1} parent=31 // pred_check
        %p897 = pneg %p100
      $region34: #{tpu_custom_call.1} parent=31 // pred_check_branch
        %899 = sbr.rel (%p897) target = $region36
      $region35: #{tpu_custom_call.1} parent=31 // pred_region
        %s900 = smul.u32 64, %s14
      $region36: #{tpu_custom_call.1} parent=31 // pred_fallthru
        _
    $region32: #{tpu_custom_call.1} parent=5 // pred_fallthru
      _
    %p901 = scmp.le.s32.totalorder 2, %s9
    // Predicated region
    $region37: #{tpu_custom_call.1} parent=5 // pred_check
      %p902 = pneg %p901
    $region38: #{tpu_custom_call.1} parent=5 // pred_check_branch
      %904 = sbr.rel (%p902) target = $region40
    $region39: #{tpu_custom_call.1} parent=5 // pred_region
      %s905 = ssub.s32 %s9, 2
      // Predicated region
      $region41: #{tpu_custom_call.1} parent=39 // pred_check
        %p906 = pneg %p106
      $region42: #{tpu_custom_call.1} parent=39 // pred_check_branch
        %908 = sbr.rel (%p906) target = $region44
      $region43: #{tpu_custom_call.1} parent=39 // pred_region
        %s909 = smul.u32 64, %s15
        %p910 = scmp.lt.s32.totalorder %s909, 127
        %s911 = scalar_select %p910, %s909, 127
        %s912 = smul.addr %s911, 8
        %s913 = scalar_lea.vmem %s3, %s912
      $region44: #{tpu_custom_call.1} parent=39 // pred_fallthru
        _
    $region40: #{tpu_custom_call.1} parent=5 // pred_fallthru
      _
  $region6: #{tpu_custom_call.1} parent=0 // loop_footer
    %s13 = sadd.s32 1, %s9
  $region7: #{tpu_custom_call.1} parent=0 // loop_footer_branch
    %8 = sbr.rel target = $region3
  $region8: #{tpu_custom_call.1} parent=0 // loop_exit
    _

</llo_original>
